<compile_context>
chip_gen: v5e
topology: v5e:2x2
jax: 0.10.0
libtpu: 0.0.40
codegen_flags: <defaults>
</compile_context>

<pallas_src>
import math

import jax
import jax.numpy as jnp
from jax.experimental import pallas as pl
from jax.experimental.pallas import tpu as pltpu


def _flatten_dma_kernel(x_hbm, o_hbm, sem):
    # Pure DMA-engine traffic: one HBM->HBM copy of the (already 2-D) input.
    # No VMEM buffers, no vld/vst work on the TensorCore.
    cp = pltpu.make_async_copy(x_hbm, o_hbm, sem)
    cp.start()
    cp.wait()


def _flatten_2d(x2d: jax.Array) -> jax.Array:
    n, flat = x2d.shape
    nbytes = n * flat * jnp.dtype(x2d.dtype).itemsize
    return pl.pallas_call(
        _flatten_dma_kernel,
        out_shape=jax.ShapeDtypeStruct((n, flat), x2d.dtype),
        in_specs=[pl.BlockSpec(memory_space=pl.ANY)],   # raw HBM ref, no auto-DMA
        out_specs=pl.BlockSpec(memory_space=pl.ANY),    # raw HBM ref
        scratch_shapes=[pltpu.SemaphoreType.DMA],
        cost_estimate=pl.CostEstimate(
            flops=0, transcendentals=0, bytes_accessed=2 * nbytes),
    )(x2d)


@jax.jit
def flatten(x: jax.Array) -> jax.Array:
    """Equivalent of torch.flatten(x, 1) with a Pallas TPU copy kernel."""
    if x.ndim <= 1:
        # torch.flatten(x, 1) is the identity for 0-D / 1-D inputs.
        return x
    n = x.shape[0]
    flat = math.prod(x.shape[1:])
    # Metadata-only reshape under XLA; matches torch.flatten's row-major order.
    x2d = x.reshape(n, flat)
    return _flatten_2d(x2d)


if __name__ == "__main__":
    key = jax.random.PRNGKey(0)
    # Small NCHW input consistent with the module's example usage.
    x = jax.random.normal(key, (2, 4, 16, 16), dtype=jnp.float32)

    y = jax.block_until_ready(flatten(x))

    # Reference: plain JAX reshape (== torch.flatten(x, 1)).
    ref = x.reshape(x.shape[0], -1)
    assert y.shape == (2, 4 * 16 * 16), y.shape
    assert y.dtype == x.dtype
    assert jnp.array_equal(y, ref), "mismatch vs reference flatten"

    print("KERNEL_OK")
</pallas_src>

<mosaic_0001>
module attributes {stable_mosaic.version = 11 : i64} {
  func.func @_flatten_dma_kernel(%arg0: memref<2x1024xf32, #tpu.memory_space<any>>, %arg1: memref<2x1024xf32, #tpu.memory_space<any>>, %arg2: memref<!tpu.dma_semaphore, #tpu.memory_space<semaphore_mem>>) attributes {dimension_semantics = [], scalar_prefetch = 0 : i64, scratch_operands = 1 : i64, tpu.core_type = #tpu.core_type<tc>} {
    tpu.enqueue_dma source(%arg0 : memref<2x1024xf32, #tpu.memory_space<any>>) target(%arg1 : memref<2x1024xf32, #tpu.memory_space<any>>) target_semaphore(%arg2 : memref<!tpu.dma_semaphore, #tpu.memory_space<semaphore_mem>>)
    tpu.wait_dma2 semaphore(%arg2 : memref<!tpu.dma_semaphore, #tpu.memory_space<semaphore_mem>>) src(%arg0 : memref<2x1024xf32, #tpu.memory_space<any>>) dst(%arg1 : memref<2x1024xf32, #tpu.memory_space<any>>)
    return
  }
}

</mosaic_0001>

<llo_original>
// kernel: flatten.1
$region0: #{flatten.1}
  #allocation0 [shape = 'u32[]', space=smem, size = 0x4, offset = 0x4, fixed_abs, tag = 'smem constant byte address 0x4 - core index']
  #allocation1 [shape = 'u32[72,128]{1,0:T(1,128)}', space=vmem, size = 0x9000, scoped, tag = 'internal scratch']
  #allocation2 [shape = 's32[1]{0}', space=sflag, size = 0x4, scoped, tag = 'scratch operand']
  #allocation3 [shape = 's32[]', space=sflag, size = 0x4, offset = 0, fixed_abs, tag = 'sflag constant byte address 0x0 - dummy sync flag']
  #allocation4 [shape = 's32[]', space=sflag, size = 0x4, offset = 0, fixed_abs, tag = 'sflag constant byte address 0x0 - dummy sync flag']
  #allocation5 [shape = 'u32[]', space=smem, size = 0x4, offset = 0x44, fixed_abs, tag = 'smem constant byte address 0x44 - assertion arg 0']
  #allocation6 [shape = 'u32[]', space=smem, size = 0x4, offset = 0x48, fixed_abs, tag = 'smem constant byte address 0x48 - assertion arg 1']
  %s0 = inlined_call_operand.vmem [shape: f32[2,1024], index: 0, kind: input, shape index: {}]
  %s1 = inlined_call_operand.hbm [shape: f32[2,1024], index: 1, kind: output, shape index: {}]
  %s2 = sld [smem:[#allocation0]]
  $region6: #{flatten.1} parent=0
    _
  %s4 = ssub.s32 1, %s2
  %s5 = scalar_select 0, %s4, %s2
  // Predicated region
  $region2: #{flatten.1} parent=0 // pred_check
    _
  $region3: #{flatten.1} parent=0 // pred_check_branch
    %7 = sbr.rel target = $region5
  $region4: #{flatten.1} parent=0 // pred_region
    %8 = sst [smem:[#allocation5]] [#allocation4]
    %9 = sst [smem:[#allocation6]] [#allocation3]
  $region5: #{flatten.1} parent=0 // pred_fallthru
    _
  %11 = shalt.err (0)
  %s13 = sshll.u32 %s0, 4
  %s14 = int_to_ptr.vmem [resolvable:$true] %s13
  %s15 = sshll.u32 %s1, 4
  %s16 = int_to_ptr.hbm [resolvable:$true] %s15
  %18 = dma.vmem_to_hbm [thread:$0]  %s14, 256, %s16, [#allocation2]
  %s19 = smul.u32 2, 1
  %s20 = smul.u32 %s19, 8
  %s21 = sshll.u32 %s20, 4
  %22 = dma.done [#allocation2], %s21
  %23 = vsyncmov [#allocation2]
  %s24 = vpop.sfrf %23
  %p25 = scmp.eq.s32.totalorder %s24, 0
  %p26 = pneg %p25
  %28 = shalt.err (%p26)

</llo_original>
